<compile_context>
chip_gen: v6e
topology: v6e:2x2x1
jax: 0.10.0
libtpu: 0.0.40
codegen_flags: <defaults>
</compile_context>

<pallas_src>
import functools

import jax
import jax.numpy as jnp
from jax import lax
from jax.experimental import pallas as pl
from jax.experimental.pallas import tpu as pltpu


def _round_up(a, b):
    return (a + b - 1) // b * b


def ffn_kernel(xw_ref, gamma_ref, beta_ref, w1_ref, b1_ref, w2_ref, b2_ref,
               o_ref, *, k1, p1, k2, p2, tS, S):
    """One (batch, seq-tile) step.

    xw_ref:  (1, 1, Wx, d_in) halo window of x, Wx = tS + (k1-1) + (k2-1)
    w1_ref:  (k1*d_in, d_hid) bf16 folded conv1 weight
    w2_ref:  (k2*d_hid, d_in) bf16 folded conv2 weight
    o_ref:   (1, tS, d_in) output tile
    """
    xL = p1 + p2                      # left halo of the x window
    Wh = tS + k2 - 1                  # rows of h needed (core + conv2 halo)

    s = pl.program_id(1)
    t0 = s * tS                       # global start row of this tile's core

    xw = xw_ref[0, 0].astype(jnp.float32)            # (Wx, d_in)

    # ---- LayerNorm over channels (eps=1e-5, biased variance) == nn.LayerNorm ----
    mean = jnp.mean(xw, axis=-1, keepdims=True)
    var = jnp.mean((xw - mean) ** 2, axis=-1, keepdims=True)
    xn = (xw - mean) * lax.rsqrt(var + 1e-5)
    xn = xn * gamma_ref[...] + beta_ref[...]         # (1, d_in) broadcast

    # Zero rows outside the real sequence ONCE (Conv1d zero-pads the normalized signal).
    g = lax.broadcasted_iota(jnp.int32, xn.shape, 0) + (t0 - xL)
    xn = jnp.where((g >= 0) & (g < S), xn, 0.0)
    xn_b = xn.astype(jnp.bfloat16)                   # bf16 MXU operand

    # ---- Conv1d #1 folded: one wide contraction over k1*d_in, f32 accumulation ----
    if k1 == 1:
        slab1 = xn_b[0:Wh]
    else:
        slab1 = jnp.concatenate([xn_b[k:k + Wh] for k in range(k1)], axis=-1)
    h = jnp.dot(slab1, w1_ref[...], preferred_element_type=jnp.float32)
    h = jnp.maximum(h + b1_ref[...], 0.0)            # bias + ReLU in f32

    # Conv #2 zero-pads relu(conv1(.)) outside [0, S): only needed if it has taps/padding.
    if k2 > 1 or p2 > 0:
        gh = lax.broadcasted_iota(jnp.int32, h.shape, 0) + (t0 - p2)
        h = jnp.where((gh >= 0) & (gh < S), h, 0.0)
    h_b = h.astype(jnp.bfloat16)

    # ---- Conv1d #2 folded ----
    if k2 == 1:
        slab2 = h_b[0:tS]
    else:
        slab2 = jnp.concatenate([h_b[k:k + tS] for k in range(k2)], axis=-1)
    out = jnp.dot(slab2, w2_ref[...], preferred_element_type=jnp.float32)
    out = out + b2_ref[...]

    # Dropout: identity in eval mode.  Residual add in f32, then store lane-dense.
    o_ref[0] = (out + xw[xL:xL + tS]).astype(o_ref.dtype)


def positionwise_ffn(x, gamma, beta, w1, b1, w2, b2,
                     fft_conv1d_kernel, fft_conv1d_padding, *, seq_tile=128):
    """x: (B, S, d_in); w1: (K1, d_in, d_hid); w2: (K2, d_hid, d_in).

    seq_tile: rows per grid step (multiple of 8; 512-1024 is a good choice on
    v5e/v6e's 128 MiB VMEM, keep it <=256 on v7x's 64 MiB).
    """
    B, S, d_in = x.shape
    k1, k2 = fft_conv1d_kernel
    p1, p2 = fft_conv1d_padding
    d_hid = w1.shape[2]

    xL = p1 + p2
    xR = (k1 - 1 - p1) + (k2 - 1 - p2)

    tS = _round_up(min(seq_tile, S), 8)
    S_pad = _round_up(S, tS)
    n_tiles = S_pad // tS
    Wx = tS + xL + xR

    # Zero-pad the sequence and materialize overlapping halo windows
    # (B, n_tiles, Wx, d_in).  Pure layout plumbing so that every kernel input is a
    # standard Blocked DMA; costs ~(xL+xR)/tS extra x traffic.
    x_pad = jnp.pad(x, ((0, 0), (xL, (S_pad - S) + xR), (0, 0)))
    x_win = jnp.stack(
        [x_pad[:, s * tS: s * tS + Wx, :] for s in range(n_tiles)], axis=1)

    # Fold conv taps into the contraction dim; keep MXU operands in bf16
    # (also halves weight VMEM, which matters on v7x).
    w1f = w1.reshape(k1 * d_in, d_hid).astype(jnp.bfloat16)
    w2f = w2.reshape(k2 * d_hid, d_in).astype(jnp.bfloat16)
    gamma32 = gamma.reshape(1, d_in).astype(jnp.float32)
    beta32 = beta.reshape(1, d_in).astype(jnp.float32)
    b1f = b1.reshape(1, d_hid).astype(jnp.float32)
    b2f = b2.reshape(1, d_in).astype(jnp.float32)

    kernel = functools.partial(ffn_kernel, k1=k1, p1=p1, k2=k2, p2=p2, tS=tS, S=S)

    out = pl.pallas_call(
        kernel,
        out_shape=jax.ShapeDtypeStruct((B, S_pad, d_in), x.dtype),
        grid_spec=pltpu.PrefetchScalarGridSpec(
            num_scalar_prefetch=0,
            grid=(B, n_tiles),
            in_specs=[
                pl.BlockSpec((1, 1, Wx, d_in), lambda b, s: (b, s, 0, 0)),   # x windows
                pl.BlockSpec((1, d_in), lambda b, s: (0, 0)),                # gamma
                pl.BlockSpec((1, d_in), lambda b, s: (0, 0)),                # beta
                pl.BlockSpec((k1 * d_in, d_hid), lambda b, s: (0, 0)),       # w1 folded
                pl.BlockSpec((1, d_hid), lambda b, s: (0, 0)),               # b1
                pl.BlockSpec((k2 * d_hid, d_in), lambda b, s: (0, 0)),       # w2 folded
                pl.BlockSpec((1, d_in), lambda b, s: (0, 0)),                # b2
            ],
            out_specs=pl.BlockSpec((1, tS, d_in), lambda b, s: (b, s, 0)),
        ),
        compiler_params=pltpu.CompilerParams(
            dimension_semantics=("parallel", "parallel"),   # batch x seq-tile: both independent
            vmem_limit_bytes=48 * 1024 * 1024,
        ),
    )(x_win, gamma32, beta32, w1f, b1f, w2f, b2f)

    return out[:, :S, :]


def reference_ffn(x, gamma, beta, w1, b1, w2, b2, kernels, pads):
    """Pure-JAX reference with identical semantics (bf16 MXU operands, f32 accumulate)."""
    x32 = x.astype(jnp.float32)
    mean = jnp.mean(x32, axis=-1, keepdims=True)
    var = jnp.mean((x32 - mean) ** 2, axis=-1, keepdims=True)
    xn = (x32 - mean) * lax.rsqrt(var + 1e-5) * gamma[0] + beta[0]

    def conv(inp_b, w, b, k, p):   # inp_b: (B, S, Cin) bf16, w: (K, Cin, Cout)
        S = inp_b.shape[1]
        padded = jnp.pad(inp_b, ((0, 0), (p, k - 1 - p), (0, 0)))
        out = jnp.zeros((inp_b.shape[0], S, w.shape[2]), jnp.float32)
        for kk in range(k):
            out = out + jnp.einsum("bsc,cd->bsd", padded[:, kk:kk + S, :],
                                   w[kk].astype(jnp.bfloat16),
                                   preferred_element_type=jnp.float32)
        return out + b[0]

    h = jnp.maximum(conv(xn.astype(jnp.bfloat16), w1, b1, kernels[0], pads[0]), 0.0)
    out = conv(h.astype(jnp.bfloat16), w2, b2, kernels[1], pads[1])
    return (out + x32).astype(x.dtype)


if __name__ == "__main__":
    # Small but lane-dense shapes (d_in multiple of 128 as the perf review recommends);
    # S=32 with seq_tile=16 exercises the seq-tiled grid + halo path.
    B, S, d_in, d_hid = 2, 32, 128, 256
    fft_conv1d_kernel = (3, 1)
    fft_conv1d_padding = (1, 0)

    key = jax.random.PRNGKey(0)
    kx, k1, k2, k3, k4, k5, k6 = jax.random.split(key, 7)

    x = jax.random.normal(kx, (B, S, d_in), dtype=jnp.float32)

    # Parameter shapes match nn.Conv1d / nn.LayerNorm in __init__ (conv weight stored as (K, Cin, Cout)).
    w1 = jax.random.normal(k1, (fft_conv1d_kernel[0], d_in, d_hid), jnp.float32) * 0.1
    b1 = jax.random.normal(k2, (1, d_hid), jnp.float32) * 0.1
    w2 = jax.random.normal(k3, (fft_conv1d_kernel[1], d_hid, d_in), jnp.float32) * 0.1
    b2 = jax.random.normal(k4, (1, d_in), jnp.float32) * 0.1
    gamma = jnp.ones((1, d_in), jnp.float32) + 0.05 * jax.random.normal(k5, (1, d_in))
    beta = 0.05 * jax.random.normal(k6, (1, d_in), jnp.float32)

    out = positionwise_ffn(x, gamma, beta, w1, b1, w2, b2,
                           fft_conv1d_kernel, fft_conv1d_padding, seq_tile=16)
    out = jax.block_until_ready(out)

    ref = reference_ffn(x, gamma, beta, w1, b1, w2, b2,
                        fft_conv1d_kernel, fft_conv1d_padding)
    assert out.shape == (B, S, d_in)
    assert jnp.allclose(out, ref, atol=3e-2, rtol=3e-2), "mismatch vs reference"

    # TODO(synk): nn.Dropout is identity here (eval mode); train-mode random masking not implemented.
    print("KERNEL_OK")
</pallas_src>

<mosaic_0001>
module attributes {stable_mosaic.version = 11 : i64} {
  func.func @ffn_kernel(%arg0: i32, %arg1: i32, %arg2: memref<1x1x18x128xf32, #tpu.memory_space<vmem>>, %arg3: memref<1x128xf32, #tpu.memory_space<vmem>>, %arg4: memref<1x128xf32, #tpu.memory_space<vmem>>, %arg5: memref<384x256xbf16, #tpu.memory_space<vmem>>, %arg6: memref<1x256xf32, #tpu.memory_space<vmem>>, %arg7: memref<256x128xbf16, #tpu.memory_space<vmem>>, %arg8: memref<1x128xf32, #tpu.memory_space<vmem>>, %arg9: memref<1x16x128xf32, #tpu.memory_space<vmem>>) attributes {dimension_semantics = [#tpu.dimension_semantics<parallel>, #tpu.dimension_semantics<parallel>], iteration_bounds = array<i64: 2, 2>, scalar_prefetch = 0 : i64, scratch_operands = 0 : i64, tpu.core_type = #tpu.core_type<tc>, window_params = [{transform_indices = @transform_0, window_bounds = array<i64: 1, 1, 18, 128>}, {pipeline_mode = #tpu.pipeline_mode<synchronous>, transform_indices = @transform_1, window_bounds = array<i64: 1, 128>}, {pipeline_mode = #tpu.pipeline_mode<synchronous>, transform_indices = @transform_2, window_bounds = array<i64: 1, 128>}, {pipeline_mode = #tpu.pipeline_mode<synchronous>, transform_indices = @transform_3, window_bounds = array<i64: 384, 256>}, {pipeline_mode = #tpu.pipeline_mode<synchronous>, transform_indices = @transform_4, window_bounds = array<i64: 1, 256>}, {pipeline_mode = #tpu.pipeline_mode<synchronous>, transform_indices = @transform_5, window_bounds = array<i64: 256, 128>}, {pipeline_mode = #tpu.pipeline_mode<synchronous>, transform_indices = @transform_6, window_bounds = array<i64: 1, 128>}, {transform_indices = @transform_7, window_bounds = array<i64: 1, 16, 128>}]} {
    %c16_i32 = arith.constant 16 : i32
    %0 = arith.muli %arg1, %c16_i32 : i32
    %c0 = arith.constant 0 : index
    %c0_0 = arith.constant 0 : index
    %c0_1 = arith.constant 0 : index
    %c0_2 = arith.constant 0 : index
    %1 = vector.load %arg2[%c0, %c0_0, %c0_1, %c0_2] : memref<1x1x18x128xf32, #tpu.memory_space<vmem>>, vector<1x1x18x128xf32>
    %2 = vector.shape_cast %1 : vector<1x1x18x128xf32> to vector<18x128xf32>
    %cst = arith.constant dense<0.000000e+00> : vector<18xf32>
    %3 = vector.multi_reduction <add>, %2, %cst [1] : vector<18x128xf32> to vector<18xf32>
    %4 = vector.shape_cast %3 : vector<18xf32> to vector<18x1xf32>
    %cst_3 = arith.constant 1.280000e+02 : f32
    %5 = vector.broadcast %cst_3 : f32 to vector<18x1xf32>
    %6 = arith.divf %4, %5 : vector<18x1xf32>
    %7 = vector.broadcast %6 : vector<18x1xf32> to vector<18x128xf32>
    %8 = arith.subf %2, %7 : vector<18x128xf32>
    %9 = arith.mulf %8, %8 : vector<18x128xf32>
    %cst_4 = arith.constant dense<0.000000e+00> : vector<18xf32>
    %10 = vector.multi_reduction <add>, %9, %cst_4 [1] : vector<18x128xf32> to vector<18xf32>
    %11 = vector.shape_cast %10 : vector<18xf32> to vector<18x1xf32>
    %cst_5 = arith.constant 1.280000e+02 : f32
    %12 = vector.broadcast %cst_5 : f32 to vector<18x1xf32>
    %13 = arith.divf %11, %12 : vector<18x1xf32>
    %14 = vector.broadcast %6 : vector<18x1xf32> to vector<18x128xf32>
    %15 = arith.subf %2, %14 : vector<18x128xf32>
    %cst_6 = arith.constant 9.99999974E-6 : f32
    %16 = vector.broadcast %cst_6 : f32 to vector<18x1xf32>
    %17 = arith.addf %13, %16 : vector<18x1xf32>
    %18 = math.rsqrt %17 : vector<18x1xf32>
    %19 = vector.broadcast %18 : vector<18x1xf32> to vector<18x128xf32>
    %20 = arith.mulf %15, %19 : vector<18x128xf32>
    %c0_7 = arith.constant 0 : index
    %c0_8 = arith.constant 0 : index
    %21 = vector.load %arg3[%c0_7, %c0_8] : memref<1x128xf32, #tpu.memory_space<vmem>>, vector<1x128xf32>
    %22 = vector.broadcast %21 : vector<1x128xf32> to vector<18x128xf32>
    %23 = arith.mulf %20, %22 : vector<18x128xf32>
    %c0_9 = arith.constant 0 : index
    %c0_10 = arith.constant 0 : index
    %24 = vector.load %arg4[%c0_9, %c0_10] : memref<1x128xf32, #tpu.memory_space<vmem>>, vector<1x128xf32>
    %25 = vector.broadcast %24 : vector<1x128xf32> to vector<18x128xf32>
    %26 = arith.addf %23, %25 : vector<18x128xf32>
    %27 = tpu.iota {dimensions = array<i32: 0>} : vector<18x128xi32>
    %c1_i32 = arith.constant 1 : i32
    %28 = arith.subi %0, %c1_i32 : i32
    %29 = vector.broadcast %28 : i32 to vector<18x128xi32>
    %30 = arith.addi %27, %29 : vector<18x128xi32>
    %c0_i32 = arith.constant 0 : i32
    %31 = vector.broadcast %c0_i32 : i32 to vector<18x128xi32>
    %32 = arith.cmpi sge, %30, %31 : vector<18x128xi32>
    %c32_i32 = arith.constant 32 : i32
    %33 = vector.broadcast %c32_i32 : i32 to vector<18x128xi32>
    %34 = arith.cmpi slt, %30, %33 : vector<18x128xi32>
    %35 = arith.andi %32, %34 : vector<18x128xi1>
    %cst_11 = arith.constant 0.000000e+00 : f32
    %36 = vector.broadcast %cst_11 : f32 to vector<18x128xf32>
    %37 = arith.select %35, %26, %36 : vector<18x128xi1>, vector<18x128xf32>
    %38 = arith.truncf %37 : vector<18x128xf32> to vector<18x128xbf16>
    %39 = vector.extract_strided_slice %38 {offsets = [0, 0], sizes = [16, 128], strides = [1, 1]} : vector<18x128xbf16> to vector<16x128xbf16>
    %40 = vector.extract_strided_slice %38 {offsets = [1, 0], sizes = [16, 128], strides = [1, 1]} : vector<18x128xbf16> to vector<16x128xbf16>
    %41 = vector.extract_strided_slice %38 {offsets = [2, 0], sizes = [16, 128], strides = [1, 1]} : vector<18x128xbf16> to vector<16x128xbf16>
    %42 = tpu.concatenate %39, %40, %41 in 1 : vector<16x128xbf16>, vector<16x128xbf16>, vector<16x128xbf16> -> vector<16x384xbf16>
    %c0_12 = arith.constant 0 : index
    %c0_13 = arith.constant 0 : index
    %43 = vector.load %arg5[%c0_12, %c0_13] : memref<384x256xbf16, #tpu.memory_space<vmem>>, vector<384x256xbf16>
    %cst_14 = arith.constant dense<0.000000e+00> : vector<16x256xf32>
    %44 = tpu.matmul %42, %43, %cst_14 {dimension_numbers = #tpu.dot_dimension_numbers<[1], [0], [0], [1], [0, 0, 1, 1], [], []>} : vector<16x384xbf16>, vector<384x256xbf16>, vector<16x256xf32> -> vector<16x256xf32>
    %c0_15 = arith.constant 0 : index
    %c0_16 = arith.constant 0 : index
    %45 = vector.load %arg6[%c0_15, %c0_16] : memref<1x256xf32, #tpu.memory_space<vmem>>, vector<1x256xf32>
    %46 = vector.broadcast %45 : vector<1x256xf32> to vector<16x256xf32>
    %47 = arith.addf %44, %46 : vector<16x256xf32>
    %cst_17 = arith.constant 0.000000e+00 : f32
    %48 = vector.broadcast %cst_17 : f32 to vector<16x256xf32>
    %49 = arith.maximumf %47, %48 : vector<16x256xf32>
    %50 = arith.truncf %49 : vector<16x256xf32> to vector<16x256xbf16>
    %c0_18 = arith.constant 0 : index
    %c0_19 = arith.constant 0 : index
    %51 = vector.load %arg7[%c0_18, %c0_19] : memref<256x128xbf16, #tpu.memory_space<vmem>>, vector<256x128xbf16>
    %cst_20 = arith.constant dense<0.000000e+00> : vector<16x128xf32>
    %52 = tpu.matmul %50, %51, %cst_20 {dimension_numbers = #tpu.dot_dimension_numbers<[1], [0], [0], [1], [0, 0, 1, 1], [], []>} : vector<16x256xbf16>, vector<256x128xbf16>, vector<16x128xf32> -> vector<16x128xf32>
    %c0_21 = arith.constant 0 : index
    %c0_22 = arith.constant 0 : index
    %53 = vector.load %arg8[%c0_21, %c0_22] : memref<1x128xf32, #tpu.memory_space<vmem>>, vector<1x128xf32>
    %54 = vector.broadcast %53 : vector<1x128xf32> to vector<16x128xf32>
    %55 = arith.addf %52, %54 : vector<16x128xf32>
    %56 = vector.extract_strided_slice %2 {offsets = [1, 0], sizes = [16, 128], strides = [1, 1]} : vector<18x128xf32> to vector<16x128xf32>
    %57 = arith.addf %55, %56 : vector<16x128xf32>
    %c0_23 = arith.constant 0 : index
    %c0_24 = arith.constant 0 : index
    %c0_25 = arith.constant 0 : index
    %58 = vector.load %arg9[%c0_23, %c0_24, %c0_25] : memref<1x16x128xf32, #tpu.memory_space<vmem>>, vector<1x16x128xf32>
    %59 = vector.shape_cast %58 : vector<1x16x128xf32> to vector<16x128xf32>
    %60 = vector.shape_cast %57 : vector<16x128xf32> to vector<1x16x128xf32>
    tpu.vector_store %arg9[%c0_23, %c0_24, %c0_25], %60 {strides = array<i32>} : memref<1x16x128xf32, #tpu.memory_space<vmem>>, vector<1x16x128xf32>,
    return
  }
  func.func @transform_0(%arg0: i32, %arg1: i32) -> (i32, i32, i32, i32) {
    %c0_i32 = arith.constant 0 : i32
    %c0_i32_0 = arith.constant 0 : i32
    %c0_i32_1 = arith.constant 0 : i32
    return %arg0, %arg1, %c0_i32, %c0_i32_0 : i32, i32, i32, i32
  }
  func.func @transform_1(%arg0: i32, %arg1: i32) -> (i32, i32) {
    %c0_i32 = arith.constant 0 : i32
    %c0_i32_0 = arith.constant 0 : i32
    %c0_i32_1 = arith.constant 0 : i32
    return %c0_i32, %c0_i32_0 : i32, i32
  }
  func.func @transform_2(%arg0: i32, %arg1: i32) -> (i32, i32) {
    %c0_i32 = arith.constant 0 : i32
    %c0_i32_0 = arith.constant 0 : i32
    %c0_i32_1 = arith.constant 0 : i32
    return %c0_i32, %c0_i32_0 : i32, i32
  }
  func.func @transform_3(%arg0: i32, %arg1: i32) -> (i32, i32) {
    %c0_i32 = arith.constant 0 : i32
    %c0_i32_0 = arith.constant 0 : i32
    %c0_i32_1 = arith.constant 0 : i32
    return %c0_i32, %c0_i32_0 : i32, i32
  }
  func.func @transform_4(%arg0: i32, %arg1: i32) -> (i32, i32) {
    %c0_i32 = arith.constant 0 : i32
    %c0_i32_0 = arith.constant 0 : i32
    %c0_i32_1 = arith.constant 0 : i32
    return %c0_i32, %c0_i32_0 : i32, i32
  }
  func.func @transform_5(%arg0: i32, %arg1: i32) -> (i32, i32) {
    %c0_i32 = arith.constant 0 : i32
    %c0_i32_0 = arith.constant 0 : i32
    %c0_i32_1 = arith.constant 0 : i32
    return %c0_i32, %c0_i32_0 : i32, i32
  }
  func.func @transform_6(%arg0: i32, %arg1: i32) -> (i32, i32) {
    %c0_i32 = arith.constant 0 : i32
    %c0_i32_0 = arith.constant 0 : i32
    %c0_i32_1 = arith.constant 0 : i32
    return %c0_i32, %c0_i32_0 : i32, i32
  }
  func.func @transform_7(%arg0: i32, %arg1: i32) -> (i32, i32, i32) {
    %c0_i32 = arith.constant 0 : i32
    %c0_i32_0 = arith.constant 0 : i32
    return %arg0, %arg1, %c0_i32 : i32, i32, i32
  }
}

</mosaic_0001>

<llo_original>
// kernel: tpu_custom_call.1
$region0: #{tpu_custom_call.1}
  #allocation0 [shape = 'u32[]', space=smem, size = 0x4, offset = 0x4, fixed_abs, tag = 'smem constant byte address 0x4 - core index']
  #allocation1 [shape = 'u32[144,128]{1,0:T(1,128)}', space=vmem, size = 0x12000, scoped, tag = 'internal scratch']
  %s0 = inlined_call_operand.vmem [shape: f32[2,2,18,128], index: 0, kind: input, shape index: {}]
  %s1 = inlined_call_operand.vmem [shape: f32[1,128], index: 1, kind: input, shape index: {}]
  %s2 = inlined_call_operand.vmem [shape: f32[1,128], index: 2, kind: input, shape index: {}]
  %s3 = inlined_call_operand.hbm [shape: bf16[384,256], index: 3, kind: input, shape index: {}]
  %s4 = inlined_call_operand.vmem [shape: f32[1,256], index: 4, kind: input, shape index: {}]
  %s5 = inlined_call_operand.vmem [shape: bf16[256,128], index: 5, kind: input, shape index: {}]
  %s6 = inlined_call_operand.vmem [shape: f32[1,128], index: 6, kind: input, shape index: {}]
  %s7 = inlined_call_operand.hbm [shape: f32[2,32,128], index: 7, kind: output, shape index: {}]
  %s8 = sld [smem:[#allocation0]]
  $region65: #{tpu_custom_call.1} parent=0
    _
  %s10 = ssub.s32 1, %s8
  %s11 = scalar_select 0, %s10, %s8
  $region1: #{tpu_custom_call.1} parent=0
    #allocation2 [shape = 'u8[196608]{0}', space=vmem, size = 0x30000, scoped, tag = 'input window, operand 3, single buffered']
    #allocation3 [shape = 's32[2]{0}', space=sflag, size = 0x8, scoped, tag = 'scoped memory for tpu_custom_call.1']
    #allocation4 [shape = 's32[2]{0}', space=sflag, size = 0x8, scoped, tag = 'scoped memory for tpu_custom_call.1']
    #allocation5 [shape = 'u8[16384]{0}', space=vmem, size = 0x4000, scoped, tag = 'output window, operand 0']
    %12 = vsyncpa [#allocation3], 0
    %13 = vsyncpa [#allocation4], 0
    %s14 = scalar_lea.sflag [#allocation4], 1
    %15 = vsyncpa %s14, 0
    loop: start=0, step=1, limit=6
    $region2: #{tpu_custom_call.1} parent=1 // loop_pre_header
      _
    $region3: #{tpu_custom_call.1} parent=1 // loop_header
      %s17 = sphi 0, %s21
      %p18 = scmp.ge.s32.totalorder %s17, 6
      %s24 = sphi 0, %s36
      %s25 = sphi 0, %s32
      %s26 = sphi 0, %s24
      %s27 = sphi 0, %s25
      %s28 = sphi 0, %s26
      %s29 = sphi 0, %s27
      %s41 = sphi 0, %s43
      %s44 = sphi 0, %s41
      %s45 = sphi 0, %s44
      %s61 = sphi 0, %s45
      %s65 = sphi 0, %s65
      %s67 = sphi 0, %s65
      %s68 = sphi 0, %s67
      %s82 = sphi 0, %s68
      %s86 = sphi 0, %s86
      %s88 = sphi 0, %s86
      %s89 = sphi 0, %s88
      %s103 = sphi 0, %s89
      %s107 = sphi 0, %s107
      %s109 = sphi 0, %s107
      %s110 = sphi 0, %s109
      %s124 = sphi 0, %s110
      %s128 = sphi 0, %s128
      %s130 = sphi 0, %s128
      %s131 = sphi 0, %s130
      %s145 = sphi 0, %s131
      %s149 = sphi 0, %s149
      %s151 = sphi 0, %s149
      %s152 = sphi 0, %s151
      %s166 = sphi 0, %s152
      %s170 = sphi 0, %s170
      %s172 = sphi 0, %s170
      %s173 = sphi 0, %s172
      %s187 = sphi 0, %s173
      %s195 = sphi 0, %s197
      %s198 = sphi 0, %s195
      %s199 = sphi 0, %s198
      %s215 = sphi 0, %s199
    $region4: #{tpu_custom_call.1} parent=1 // loop_header_branch
      %20 = sbr.rel (%p18) target = $region8
    $region5: #{tpu_custom_call.1} parent=1 // loop_body
      %s22 = ssub.s32 %s17, 1
      %s23 = ssub.s32 %s17, 2
      %s30 = sadd.s32 1, %s25
      %p31 = scmp.ge.s32.totalorder %s30, 2
      %s32 = scalar_select %p31, 0, %s30
      %s33 = sadd.s32 1, %s24
      %s34 = scalar_select %p31, %s33, %s24
      %p35 = scmp.ge.s32.totalorder %s34, 2
      %s36 = scalar_select %p35, 0, %s34
      %s37 = ssub.s32 %s24, %s36
      %s38 = ssub.s32 %s25, %s32
      %s39 = sor.u32 %s37, %s38
      %p40 = scmp.eq.s32.totalorder %s39, 0
      %s42 = sadd.s32 %s41, 1
      %s43 = scalar_select %p40, %s41, %s42
      %p46 = pneg %p40
      %p47 = scmp.eq.s32.totalorder %s17, 3
      %p48 = por %p46, %p47
      %p49 = scmp.ne.s32.totalorder %s41, %s44
      %p50 = scmp.eq.s32.totalorder %s17, 0
      %p51 = por %p49, %p50
      %p52 = scmp.ne.s32.totalorder %s41, %s44
      %p53 = scmp.eq.s32.totalorder %s22, 3
      %p54 = por %p52, %p53
      %p55 = scmp.ne.s32.totalorder %s44, %s45
      %p56 = scmp.eq.s32.totalorder %s22, 0
      %p57 = por %p55, %p56
      %p58 = scmp.ne.s32.totalorder %s44, %s45
      %p59 = scmp.eq.s32.totalorder %s23, 3
      %p60 = por %p58, %p59
      %p62 = scmp.ne.s32.totalorder %s45, %s61
      %p63 = scmp.eq.s32.totalorder %s23, 0
      %p64 = por %p62, %p63
      %s66 = sadd.s32 %s65, 1
      %p69 = scmp.eq.s32.totalorder %s17, 3
      %p70 = scmp.ne.s32.totalorder %s65, %s67
      %p71 = scmp.eq.s32.totalorder %s17, 0
      %p72 = por %p70, %p71
      %p73 = scmp.ne.s32.totalorder %s65, %s67
      %p74 = scmp.eq.s32.totalorder %s22, 3
      %p75 = por %p73, %p74
      %p76 = scmp.ne.s32.totalorder %s67, %s68
      %p77 = scmp.eq.s32.totalorder %s22, 0
      %p78 = por %p76, %p77
      %p79 = scmp.ne.s32.totalorder %s67, %s68
      %p80 = scmp.eq.s32.totalorder %s23, 3
      %p81 = por %p79, %p80
      %p83 = scmp.ne.s32.totalorder %s68, %s82
      %p84 = scmp.eq.s32.totalorder %s23, 0
      %p85 = por %p83, %p84
      %s87 = sadd.s32 %s86, 1
      %p90 = scmp.eq.s32.totalorder %s17, 3
      %p91 = scmp.ne.s32.totalorder %s86, %s88
      %p92 = scmp.eq.s32.totalorder %s17, 0
      %p93 = por %p91, %p92
      %p94 = scmp.ne.s32.totalorder %s86, %s88
      %p95 = scmp.eq.s32.totalorder %s22, 3
      %p96 = por %p94, %p95
      %p97 = scmp.ne.s32.totalorder %s88, %s89
      %p98 = scmp.eq.s32.totalorder %s22, 0
      %p99 = por %p97, %p98
      %p100 = scmp.ne.s32.totalorder %s88, %s89
      %p101 = scmp.eq.s32.totalorder %s23, 3
      %p102 = por %p100, %p101
      %p104 = scmp.ne.s32.totalorder %s89, %s103
      %p105 = scmp.eq.s32.totalorder %s23, 0
      %p106 = por %p104, %p105
      %s108 = sadd.s32 %s107, 1
      %p111 = scmp.eq.s32.totalorder %s17, 3
      %p112 = scmp.ne.s32.totalorder %s107, %s109
      %p113 = scmp.eq.s32.totalorder %s17, 0
      %p114 = por %p112, %p113
      %p115 = scmp.ne.s32.totalorder %s107, %s109
      %p116 = scmp.eq.s32.totalorder %s22, 3
      %p117 = por %p115, %p116
      %p118 = scmp.ne.s32.totalorder %s109, %s110
      %p119 = scmp.eq.s32.totalorder %s22, 0
      %p120 = por %p118, %p119
      %p121 = scmp.ne.s32.totalorder %s109, %s110
      %p122 = scmp.eq.s32.totalorder %s23, 3
      %p123 = por %p121, %p122
      %p125 = scmp.ne.s32.totalorder %s110, %s124
      %p126 = scmp.eq.s32.totalorder %s23, 0
      %p127 = por %p125, %p126
      %s129 = sadd.s32 %s128, 1
      %p132 = scmp.eq.s32.totalorder %s17, 3
      %p133 = scmp.ne.s32.totalorder %s128, %s130
      %p134 = scmp.eq.s32.totalorder %s17, 0
      %p135 = por %p133, %p134
      %p136 = scmp.ne.s32.totalorder %s128, %s130
      %p137 = scmp.eq.s32.totalorder %s22, 3
      %p138 = por %p136, %p137
      %p139 = scmp.ne.s32.totalorder %s130, %s131
      %p140 = scmp.eq.s32.totalorder %s22, 0
      %p141 = por %p139, %p140
      %p142 = scmp.ne.s32.totalorder %s130, %s131
      %p143 = scmp.eq.s32.totalorder %s23, 3
      %p144 = por %p142, %p143
      %p146 = scmp.ne.s32.totalorder %s131, %s145
      %p147 = scmp.eq.s32.totalorder %s23, 0
      %p148 = por %p146, %p147
      %s150 = sadd.s32 %s149, 1
      %p153 = scmp.eq.s32.totalorder %s17, 3
      %p154 = scmp.ne.s32.totalorder %s149, %s151
      %p155 = scmp.eq.s32.totalorder %s17, 0
      %p156 = por %p154, %p155
      %p157 = scmp.ne.s32.totalorder %s149, %s151
      %p158 = scmp.eq.s32.totalorder %s22, 3
      %p159 = por %p157, %p158
      %p160 = scmp.ne.s32.totalorder %s151, %s152
      %p161 = scmp.eq.s32.totalorder %s22, 0
      %p162 = por %p160, %p161
      %p163 = scmp.ne.s32.totalorder %s151, %s152
      %p164 = scmp.eq.s32.totalorder %s23, 3
      %p165 = por %p163, %p164
      %p167 = scmp.ne.s32.totalorder %s152, %s166
      %p168 = scmp.eq.s32.totalorder %s23, 0
      %p169 = por %p167, %p168
      %s171 = sadd.s32 %s170, 1
      %p174 = scmp.eq.s32.totalorder %s17, 3
      %p175 = scmp.ne.s32.totalorder %s170, %s172
      %p176 = scmp.eq.s32.totalorder %s17, 0
      %p177 = por %p175, %p176
      %p178 = scmp.ne.s32.totalorder %s170, %s172
      %p179 = scmp.eq.s32.totalorder %s22, 3
      %p180 = por %p178, %p179
      %p181 = scmp.ne.s32.totalorder %s172, %s173
      %p182 = scmp.eq.s32.totalorder %s22, 0
      %p183 = por %p181, %p182
      %p184 = scmp.ne.s32.totalorder %s172, %s173
      %p185 = scmp.eq.s32.totalorder %s23, 3
      %p186 = por %p184, %p185
      %p188 = scmp.ne.s32.totalorder %s173, %s187
      %p189 = scmp.eq.s32.totalorder %s23, 0
      %p190 = por %p188, %p189
      %s191 = ssub.s32 %s24, %s36
      %s192 = ssub.s32 %s25, %s32
      %s193 = sor.u32 %s191, %s192
      %p194 = scmp.eq.s32.totalorder %s193, 0
      %s196 = sadd.s32 %s195, 1
      %s197 = scalar_select %p194, %s195, %s196
      %p200 = pneg %p194
      %p201 = scmp.eq.s32.totalorder %s17, 3
      %p202 = por %p200, %p201
      %p203 = scmp.ne.s32.totalorder %s195, %s198
      %p204 = scmp.eq.s32.totalorder %s17, 0
      %p205 = por %p203, %p204
      %p206 = scmp.ne.s32.totalorder %s195, %s198
      %p207 = scmp.eq.s32.totalorder %s22, 3
      %p208 = por %p206, %p207
      %p209 = scmp.ne.s32.totalorder %s198, %s199
      %p210 = scmp.eq.s32.totalorder %s22, 0
      %p211 = por %p209, %p210
      %p212 = scmp.ne.s32.totalorder %s198, %s199
      %p213 = scmp.eq.s32.totalorder %s23, 3
      %p214 = por %p212, %p213
      %p216 = scmp.ne.s32.totalorder %s199, %s215
      %p217 = scmp.eq.s32.totalorder %s23, 0
      %p218 = por %p216, %p217
      %p219 = scmp.le.s32.totalorder 1, %s17
      %p220 = scmp.lt.s32.totalorder %s17, 5
      %p221 = pnand %p219, %p220
      %p222 = pneg %p221
      // Predicated region
      $region9: #{tpu_custom_call.1} parent=5 // pred_check
        _
      $region10: #{tpu_custom_call.1} parent=5 // pred_check_branch
        %224 = sbr.rel (%p221) target = $region12
      $region11: #{tpu_custom_call.1} parent=5 // pred_region
        %s225 = ssub.s32 %s17, 1
        // Predicated region
        $region13: #{tpu_custom_call.1} parent=11 // pred_check
          %p226 = pneg %p78
        $region14: #{tpu_custom_call.1} parent=11 // pred_check_branch
          %228 = sbr.rel (%p226) target = $region16
        $region15: #{tpu_custom_call.1} parent=11 // pred_region
          _
        $region16: #{tpu_custom_call.1} parent=11 // pred_fallthru
          _
        // Predicated region
        $region17: #{tpu_custom_call.1} parent=11 // pred_check
          %p229 = pneg %p99
        $region18: #{tpu_custom_call.1} parent=11 // pred_check_branch
          %231 = sbr.rel (%p229) target = $region20
        $region19: #{tpu_custom_call.1} parent=11 // pred_region
          _
        $region20: #{tpu_custom_call.1} parent=11 // pred_fallthru
          _
        // Predicated region
        $region21: #{tpu_custom_call.1} parent=11 // pred_check
          %p232 = pneg %p120
        $region22: #{tpu_custom_call.1} parent=11 // pred_check_branch
          %234 = sbr.rel (%p232) target = $region24
        $region23: #{tpu_custom_call.1} parent=11 // pred_region
          %s236 = ssub.s32 6144, 6144
          %237 = vsyncadd [#allocation3], %s236
          %s238 = sshll.u32 [#allocation2], 4
          %s239 = int_to_ptr.vmem [resolvable:$true] %s238
          %244 = dma.hbm_to_vmem [thread:$0]  %s3, 6144, %s239, [#allocation3], 128, 128, 8
        $region24: #{tpu_custom_call.1} parent=11 // pred_fallthru
          _
        // Predicated region
        $region25: #{tpu_custom_call.1} parent=11 // pred_check
          %p245 = pneg %p141
        $region26: #{tpu_custom_call.1} parent=11 // pred_check_branch
          %247 = sbr.rel (%p245) target = $region28
        $region27: #{tpu_custom_call.1} parent=11 // pred_region
          _
        $region28: #{tpu_custom_call.1} parent=11 // pred_fallthru
          _
        // Predicated region
        $region29: #{tpu_custom_call.1} parent=11 // pred_check
          %p248 = pneg %p162
        $region30: #{tpu_custom_call.1} parent=11 // pred_check_branch
          %250 = sbr.rel (%p248) target = $region32
        $region31: #{tpu_custom_call.1} parent=11 // pred_region
          _
        $region32: #{tpu_custom_call.1} parent=11 // pred_fallthru
          _
        // Predicated region
        $region33: #{tpu_custom_call.1} parent=11 // pred_check
          %p251 = pneg %p183
        $region34: #{tpu_custom_call.1} parent=11 // pred_check_branch
          %253 = sbr.rel (%p251) target = $region36
        $region35: #{tpu_custom_call.1} parent=11 // pred_region
          _
        $region36: #{tpu_custom_call.1} parent=11 // pred_fallthru
          _
      $region12: #{tpu_custom_call.1} parent=5 // pred_fallthru
        _
      %p254 = scmp.lt.s32.totalorder %s17, 4
      // Predicated region
      $region37: #{tpu_custom_call.1} parent=5 // pred_check
        %p255 = pneg %p254
      $region38: #{tpu_custom_call.1} parent=5 // pred_check_branch
        %257 = sbr.rel (%p255) target = $region40
      $region39: #{tpu_custom_call.1} parent=5 // pred_region
        // Predicated region
        $region41: #{tpu_custom_call.1} parent=39 // pred_check
          %p258 = pneg %p51
        $region42: #{tpu_custom_call.1} parent=39 // pred_check_branch
          %260 = sbr.rel (%p258) target = $region44
        $region43: #{tpu_custom_call.1} parent=39 // pred_region
          %p261 = scmp.lt.s32.totalorder %s24, 1
          %s262 = scalar_select %p261, %s24, 1
          %p263 = scmp.lt.s32.totalorder %s25, 1
          %s264 = scalar_select %p263, %s25, 1
          %s265 = smul.addr %s264, 3
          %s266 = smul.addr %s262, 6
          %s267 = sadd.s32 %s265, %s266
          %s268 = smul.addr %s267, 8
          %s269 = scalar_lea.vmem %s0, %s268
        $region44: #{tpu_custom_call.1} parent=39 // pred_fallthru
          _
      $region40: #{tpu_custom_call.1} parent=5 // pred_fallthru
        _
      %p270 = scmp.le.s32.totalorder 1, %s17
      %p271 = scmp.lt.s32.totalorder %s17, 5
      %p272 = pnand %p270, %p271
      %p273 = pneg %p272
      // Predicated region
      $region45: #{tpu_custom_call.1} parent=5 // pred_check
        _
      $region46: #{tpu_custom_call.1} parent=5 // pred_check_branch
        %275 = sbr.rel (%p272) target = $region48
      $region47: #{tpu_custom_call.1} parent=5 // pred_region
        %s276 = ssub.s32 %s17, 1
        // Predicated region
        $region49: #{tpu_custom_call.1} parent=47 // pred_check
          %p277 = pneg %p120
        $region50: #{tpu_custom_call.1} parent=47 // pred_check_branch
          %279 = sbr.rel (%p277) target = $region52
        $region51: #{tpu_custom_call.1} parent=47 // pred_region
          %280 = dma.done [#allocation3], 6144
        $region52: #{tpu_custom_call.1} parent=47 // pred_fallthru
          _
        %p281 = scmp.lt.s32.totalorder %s26, 1
        %s282 = scalar_select %p281, %s26, 1
        %p283 = scmp.lt.s32.totalorder %s27, 1
        %s284 = scalar_select %p283, %s27, 1
        %s285 = smul.addr %s284, 3
        %s286 = smul.addr %s282, 6
        %s287 = sadd.s32 %s285, %s286
        %s288 = smul.addr %s287, 8
        %s289 = scalar_lea.vmem %s0, %s288
        %p290 = pneg %p57
        %p291 = pneg %p54
        %p292 = pneg %p78
        %p293 = pneg %p75
        %p294 = pneg %p99
        %p295 = pneg %p96
        %p296 = pneg %p120
        %p297 = pneg %p117
        %p298 = pneg %p141
        %p299 = pneg %p138
        %p300 = pneg %p162
        %p301 = pneg %p159
        %p302 = pneg %p183
        %p303 = pneg %p180
        %p304 = pneg %p211
        %p305 = pneg %p208
        %s306 = sand.u32 %s198, 1
        %s307 = scalar_lea.sflag [#allocation4], %s306
        %s308 = sand.u32 %s198, 1
        %s309 = smul.addr %s308, 16
        %s310 = scalar_lea.vmem [#allocation5], %s309
        %p311 = scmp.lt.s32.totalorder %s26, 1
        %s312 = scalar_select %p311, %s26, 1
        %p313 = scmp.lt.s32.totalorder %s27, 1
        %s314 = scalar_select %p313, %s27, 1
        %s315 = smul.addr %s314, 3
        %s316 = smul.addr %s312, 6
        %s317 = sadd.s32 %s315, %s316
        %s318 = smul.addr %s317, 8
        %s319 = scalar_lea.vmem %s0, %s318
        %s320 = smul.u32 2, %s27
        %s322 = smul.u32 %s27, 16
        %v323 = vld [vmem:[%s319] sm:$0xff]
        %v324 = vld [vmem:[%s319 + $0x8] sm:$0xff]
        %v325 = vld [vmem:[%s319 + $0x10] sm:$0x3]
        %326 = vadd.xlane.f32.xlu0 %v323
        %v327 = vpop.xlane.xlu0 %326
        %328 = vadd.xlane.f32.xlu0 %v324
        %v329 = vpop.xlane.xlu0 %328
        %vm330 = vcmask 1041408
        %v331 = vsel %vm330, %v325, 0.0
        %332 = vadd.xlane.f32.xlu0 %v331
        %v333 = vpop.xlane.xlu0 %332
        %v334 = vrcp.pop 128.0
        %v335 = vmul.f32 %v327, %v334
        %v336 = vmul.f32 %v329, %v334
        %v337 = vmul.f32 %v333, %v334
        %v338 = vsub.f32 %v323, %v335
        %v339 = vsub.f32 %v324, %v336
        %v340 = vsub.f32 %v325, %v337
        %v341 = vmul.f32 %v338, %v338
        %v342 = vmul.f32 %v339, %v339
        %v343 = vmul.f32 %v340, %v340
        %344 = vadd.xlane.f32.xlu0 %v341
        %v345 = vpop.xlane.xlu0 %344
        %346 = vadd.xlane.f32.xlu0 %v342
        %v347 = vpop.xlane.xlu0 %346
        %v348 = vsel %vm330, %v343, 0.0
        %349 = vadd.xlane.f32.xlu0 %v348
        %v350 = vpop.xlane.xlu0 %349
        %v351 = vmul.f32 %v345, %v334
        %v352 = vmul.f32 %v347, %v334
        %v353 = vmul.f32 %v350, %v334
        %v354 = vadd.f32 %v351, 1e-05
        %v355 = vadd.f32 %v352, 1e-05
        %v356 = vadd.f32 %v353, 1e-05
        %v357 = vrsqrt.pop %v354
        %v358 = vrsqrt.pop %v355
        %v359 = vrsqrt.pop %v356
        %v360 = vmul.f32 %v338, %v357
        %v361 = vmul.f32 %v339, %v358
        %v362 = vmul.f32 %v340, %v359
        %v363 = vld [vmem:[%s1] sm:$0x1]
        %v365 = vlaneseq
        %v366 = vshrl.u32 %v365, 7
        %v367 = vsub.s32 0, %v366
        %v368 = vrot.slane %v363, %v367
        %v370 = vmul.f32 %v360, %v368
        %v371 = vmul.f32 %v361, %v368
        %v372 = vmul.f32 %v362, %v368
        %v373 = vld [vmem:[%s2] sm:$0x1]
        %v375 = vlaneseq
        %v376 = vshrl.u32 %v375, 7
        %v377 = vsub.s32 0, %v376
        %v378 = vrot.slane %v373, %v377
        %v380 = vadd.f32 %v370, %v378
        %v381 = vadd.f32 %v371, %v378
        %v382 = vadd.f32 %v372, %v378
        %v383 = vlaneseq
        %v384 = vshrl.u32 %v383, 7
        %v385 = vadd.s32 %v384, 8
        %v386 = vadd.s32 %v384, 16
        %s387 = ssub.s32 %s322, 1
        %v388 = vstv %s387
        %v389 = vadd.s32 %v384, %v388
        %v390 = vadd.s32 %v385, %v388
        %v391 = vadd.s32 %v386, %v388
        %vm392 = vcmp.ge.s32.totalorder %v389, 0
        %vm393 = vcmp.ge.s32.totalorder %v390, 0
        %vm394 = vcmp.ge.s32.totalorder %v391, 0
        %vm395 = vcmp.lt.s32.totalorder %v389, 32
        %vm396 = vcmp.lt.s32.totalorder %v390, 32
        %vm397 = vcmp.lt.s32.totalorder %v391, 32
        %vm398 = vmand %vm392, %vm395
        %vm399 = vmand %vm393, %vm396
        %vm400 = vmand %vm394, %vm397
        %v401 = vsel %vm398, %v380, 0.0
        %v402 = vsel %vm399, %v381, 0.0
        %v403 = vsel %vm400, %v382, 0.0
        %v404 = vpack.c.bf16 %v402, %v401
        %v405 = vpack.c.bf16 %v403, %v403
        %vm406 = vsmask.f32 7424
        %v408 = vshrl.u32 %v404, 16
        %v410 = vshll.u32 %v404, 16
        %v412 = vrot.slane %v410, 1
        %v413 = vor.u32 %v408, %v412
        %v415 = vshll.u32 %v405, 16
        %v417 = vrot.slane %v415, 1
        %v418 = vsel %vm406, %v413, %v417
        %vm422 = vcmask 1046528
        %v423 = vrot.slane %v404, 1
        %v424 = vrot.slane %v405, 1
        %v425 = vsel %vm422, %v423, %v424
        %v427 = vld [vmem:[#allocation2] sm:$0xff]
        %v428 = vld [vmem:[#allocation2 + $0x8] sm:$0xff]
        %v429 = vld [vmem:[#allocation2 + $0x10] sm:$0xff]
        %v430 = vld [vmem:[#allocation2 + $0x18] sm:$0xff]
        %v431 = vld [vmem:[#allocation2 + $0x20] sm:$0xff]
        %v432 = vld [vmem:[#allocation2 + $0x28] sm:$0xff]
        %v433 = vld [vmem:[#allocation2 + $0x30] sm:$0xff]
        %v434 = vld [vmem:[#allocation2 + $0x38] sm:$0xff]
        %v435 = vld [vmem:[#allocation2 + $0x40] sm:$0xff]
        %v436 = vld [vmem:[#allocation2 + $0x48] sm:$0xff]
        %v437 = vld [vmem:[#allocation2 + $0x50] sm:$0xff]
        %v438 = vld [vmem:[#allocation2 + $0x58] sm:$0xff]
        %v439 = vld [vmem:[#allocation2 + $0x60] sm:$0xff]
        %v440 = vld [vmem:[#allocation2 + $0x68] sm:$0xff]
        %v441 = vld [vmem:[#allocation2 + $0x70] sm:$0xff]
        %v442 = vld [vmem:[#allocation2 + $0x78] sm:$0xff]
        %v443 = vld [vmem:[#allocation2 + $0x80] sm:$0xff]
        %v444 = vld [vmem:[#allocation2 + $0x88] sm:$0xff]
        %v445 = vld [vmem:[#allocation2 + $0x90] sm:$0xff]
        %v446 = vld [vmem:[#allocation2 + $0x98] sm:$0xff]
        %v447 = vld [vmem:[#allocation2 + $0xa0] sm:$0xff]
        %v448 = vld [vmem:[#allocation2 + $0xa8] sm:$0xff]
        %v449 = vld [vmem:[#allocation2 + $0xb0] sm:$0xff]
        %v450 = vld [vmem:[#allocation2 + $0xb8] sm:$0xff]
        %v451 = vld [vmem:[#allocation2 + $0xc0] sm:$0xff]
        %v452 = vld [vmem:[#allocation2 + $0xc8] sm:$0xff]
        %v453 = vld [vmem:[#allocation2 + $0xd0] sm:$0xff]
        %v454 = vld [vmem:[#allocation2 + $0xd8] sm:$0xff]
        %v455 = vld [vmem:[#allocation2 + $0xe0] sm:$0xff]
        %v456 = vld [vmem:[#allocation2 + $0xe8] sm:$0xff]
        %v457 = vld [vmem:[#allocation2 + $0xf0] sm:$0xff]
        %v458 = vld [vmem:[#allocation2 + $0xf8] sm:$0xff]
        %v459 = vld [vmem:[#allocation2 + $0x100] sm:$0xff]
        %v460 = vld [vmem:[#allocation2 + $0x108] sm:$0xff]
        %v461 = vld [vmem:[#allocation2 + $0x110] sm:$0xff]
        %v462 = vld [vmem:[#allocation2 + $0x118] sm:$0xff]
        %v463 = vld [vmem:[#allocation2 + $0x120] sm:$0xff]
        %v464 = vld [vmem:[#allocation2 + $0x128] sm:$0xff]
        %v465 = vld [vmem:[#allocation2 + $0x130] sm:$0xff]
        %v466 = vld [vmem:[#allocation2 + $0x138] sm:$0xff]
        %v467 = vld [vmem:[#allocation2 + $0x140] sm:$0xff]
        %v468 = vld [vmem:[#allocation2 + $0x148] sm:$0xff]
        %v469 = vld [vmem:[#allocation2 + $0x150] sm:$0xff]
        %v470 = vld [vmem:[#allocation2 + $0x158] sm:$0xff]
        %v471 = vld [vmem:[#allocation2 + $0x160] sm:$0xff]
        %v472 = vld [vmem:[#allocation2 + $0x168] sm:$0xff]
        %v473 = vld [vmem:[#allocation2 + $0x170] sm:$0xff]
        %v474 = vld [vmem:[#allocation2 + $0x178] sm:$0xff]
        %v475 = vld [vmem:[%s4] sm:$0x3]
        %v477 = vlaneseq
        %v478 = vshrl.u32 %v477, 7
        %v479 = vsub.s32 0, %v478
        %v480 = vrot.slane %v475, %v479
        %v481 = vlaneseq
        %v482 = vshrl.u32 %v481, 7
        %v483 = vsub.s32 1, %v482
        %v484 = vrot.slane %v475, %v483
        %v535 = vunpack.c.l.b16 %v427
        %v536 = vunpack.c.h.b16 %v427
        %v537 = vunpack.c.l.b16 %v428
        %v538 = vunpack.c.h.b16 %v428
        %v539 = vunpack.c.l.b16 %v429
        %v540 = vunpack.c.h.b16 %v429
        %v541 = vunpack.c.l.b16 %v430
        %v542 = vunpack.c.h.b16 %v430
        %v543 = vunpack.c.l.b16 %v431
        %v544 = vunpack.c.h.b16 %v431
        %v545 = vunpack.c.l.b16 %v432
        %v546 = vunpack.c.h.b16 %v432
        %v547 = vunpack.c.l.b16 %v433
        %v548 = vunpack.c.h.b16 %v433
        %v549 = vunpack.c.l.b16 %v434
        %v550 = vunpack.c.h.b16 %v434
        %v551 = vunpack.c.l.b16 %v435
        %v552 = vunpack.c.h.b16 %v435
        %v553 = vunpack.c.l.b16 %v436
        %v554 = vunpack.c.h.b16 %v436
        %v555 = vunpack.c.l.b16 %v437
        %v556 = vunpack.c.h.b16 %v437
        %v557 = vunpack.c.l.b16 %v438
        %v558 = vunpack.c.h.b16 %v438
        %v559 = vunpack.c.l.b16 %v439
        %v560 = vunpack.c.h.b16 %v439
        %v561 = vunpack.c.l.b16 %v440
        %v562 = vunpack.c.h.b16 %v440
        %v563 = vunpack.c.l.b16 %v441
        %v564 = vunpack.c.h.b16 %v441
        %v565 = vunpack.c.l.b16 %v442
        %v566 = vunpack.c.h.b16 %v442
        %v567 = vunpack.c.l.b16 %v443
        %v568 = vunpack.c.h.b16 %v443
        %v569 = vunpack.c.l.b16 %v444
        %v570 = vunpack.c.h.b16 %v444
        %v571 = vunpack.c.l.b16 %v445
        %v572 = vunpack.c.h.b16 %v445
        %v573 = vunpack.c.l.b16 %v446
        %v574 = vunpack.c.h.b16 %v446
        %v575 = vunpack.c.l.b16 %v447
        %v576 = vunpack.c.h.b16 %v447
        %v577 = vunpack.c.l.b16 %v448
        %v578 = vunpack.c.h.b16 %v448
        %v579 = vunpack.c.l.b16 %v449
        %v580 = vunpack.c.h.b16 %v449
        %v581 = vunpack.c.l.b16 %v450
        %v582 = vunpack.c.h.b16 %v450
        %v583 = vunpack.c.l.b16 %v451
        %v584 = vunpack.c.h.b16 %v451
        %v585 = vunpack.c.l.b16 %v452
        %v586 = vunpack.c.h.b16 %v452
        %v587 = vunpack.c.l.b16 %v453
        %v588 = vunpack.c.h.b16 %v453
        %v589 = vunpack.c.l.b16 %v454
        %v590 = vunpack.c.h.b16 %v454
        %v591 = vunpack.c.l.b16 %v455
        %v592 = vunpack.c.h.b16 %v455
        %v593 = vunpack.c.l.b16 %v456
        %v594 = vunpack.c.h.b16 %v456
        %v595 = vunpack.c.l.b16 %v457
        %v596 = vunpack.c.h.b16 %v457
        %v597 = vunpack.c.l.b16 %v458
        %v598 = vunpack.c.h.b16 %v458
        %v599 = vunpack.c.l.b16 %v459
        %v600 = vunpack.c.h.b16 %v459
        %v601 = vunpack.c.l.b16 %v460
        %v602 = vunpack.c.h.b16 %v460
        %v603 = vunpack.c.l.b16 %v461
        %v604 = vunpack.c.h.b16 %v461
        %v605 = vunpack.c.l.b16 %v462
        %v606 = vunpack.c.h.b16 %v462
        %v607 = vunpack.c.l.b16 %v463
        %v608 = vunpack.c.h.b16 %v463
        %v609 = vunpack.c.l.b16 %v464
        %v610 = vunpack.c.h.b16 %v464
        %v611 = vunpack.c.l.b16 %v465
        %v612 = vunpack.c.h.b16 %v465
        %v613 = vunpack.c.l.b16 %v466
        %v614 = vunpack.c.h.b16 %v466
        %v615 = vunpack.c.l.b16 %v467
        %v616 = vunpack.c.h.b16 %v467
        %v617 = vunpack.c.l.b16 %v468
        %v618 = vunpack.c.h.b16 %v468
        %v619 = vunpack.c.l.b16 %v469
        %v620 = vunpack.c.h.b16 %v469
        %v621 = vunpack.c.l.b16 %v470
        %v622 = vunpack.c.h.b16 %v470
        %v623 = vunpack.c.l.b16 %v471
        %v624 = vunpack.c.h.b16 %v471
        %v625 = vunpack.c.l.b16 %v472
        %v626 = vunpack.c.h.b16 %v472
        %v627 = vunpack.c.l.b16 %v473
        %v628 = vunpack.c.h.b16 %v473
        %v629 = vunpack.c.l.b16 %v474
        %v630 = vunpack.c.h.b16 %v474
        %v631 = vpack.c.b16 %v537, %v535
        %v632 = vpack.c.b16 %v538, %v536
        %v633 = vpack.c.b16 %v541, %v539
        %v634 = vpack.c.b16 %v542, %v540
        %v635 = vpack.c.b16 %v545, %v543
        %v636 = vpack.c.b16 %v546, %v544
        %v637 = vpack.c.b16 %v549, %v547
        %v638 = vpack.c.b16 %v550, %v548
        %v639 = vpack.c.b16 %v553, %v551
        %v640 = vpack.c.b16 %v554, %v552
        %v641 = vpack.c.b16 %v557, %v555
        %v642 = vpack.c.b16 %v558, %v556
        %v643 = vpack.c.b16 %v561, %v559
        %v644 = vpack.c.b16 %v562, %v560
        %v645 = vpack.c.b16 %v565, %v563
        %v646 = vpack.c.b16 %v566, %v564
        %v647 = vpack.c.b16 %v569, %v567
        %v648 = vpack.c.b16 %v570, %v568
        %v649 = vpack.c.b16 %v573, %v571
        %v650 = vpack.c.b16 %v574, %v572
        %v651 = vpack.c.b16 %v577, %v575
        %v652 = vpack.c.b16 %v578, %v576
        %v653 = vpack.c.b16 %v581, %v579
        %v654 = vpack.c.b16 %v582, %v580
        %v655 = vpack.c.b16 %v585, %v583
        %v656 = vpack.c.b16 %v586, %v584
        %v657 = vpack.c.b16 %v589, %v587
        %v658 = vpack.c.b16 %v590, %v588
        %v659 = vpack.c.b16 %v593, %v591
        %v660 = vpack.c.b16 %v594, %v592
        %v661 = vpack.c.b16 %v597, %v595
        %v662 = vpack.c.b16 %v598, %v596
        %v663 = vpack.c.b16 %v601, %v599
        %v664 = vpack.c.b16 %v602, %v600
        %v665 = vpack.c.b16 %v605, %v603
        %v666 = vpack.c.b16 %v606, %v604
        %v667 = vpack.c.b16 %v609, %v607
        %v668 = vpack.c.b16 %v610, %v608
        %v669 = vpack.c.b16 %v613, %v611
        %v670 = vpack.c.b16 %v614, %v612
        %v671 = vpack.c.b16 %v617, %v615
        %v672 = vpack.c.b16 %v618, %v616
        %v673 = vpack.c.b16 %v621, %v619
        %v674 = vpack.c.b16 %v622, %v620
        %v675 = vpack.c.b16 %v625, %v623
        %v676 = vpack.c.b16 %v626, %v624
        %v677 = vpack.c.b16 %v629, %v627
        %v678 = vpack.c.b16 %v630, %v628
        %727 = vmatprep.subr.bf16.mxu0 %v646
        %728 = vmatpush1.bf16.msra.mxu0 %v645
        %729 = vmatprep.subr.bf16.mxu0 %v644
        %730 = vmatpush1.bf16.msra.mxu0 %v643
        %731 = vmatprep.subr.bf16.mxu0 %v642
        %732 = vmatpush1.bf16.msra.mxu0 %v641
        %733 = vmatprep.subr.bf16.mxu0 %v640
        %734 = vmatpush1.bf16.msra.mxu0 %v639
        %735 = vmatprep.subr.bf16.mxu0 %v638
        %736 = vmatpush1.bf16.msra.mxu0 %v637
        %737 = vmatprep.subr.bf16.mxu0 %v636
        %738 = vmatpush1.bf16.msra.mxu0 %v635
        %739 = vmatprep.subr.bf16.mxu0 %v634
        %740 = vmatpush1.bf16.msra.mxu0 %v633
        %741 = vmatprep.subr.bf16.mxu0 %v632
        %742 = vmatpush1.bf16.msra.mxu0 %v631
        %743 = vmatprep.subr.bf16.mxu0 %v662
        %744 = vmatpush2.bf16.msra.mxu0 %v661
        %745 = vmatprep.subr.bf16.mxu0 %v660
        %746 = vmatpush2.bf16.msra.mxu0 %v659
        %747 = vmatprep.subr.bf16.mxu0 %v658
        %748 = vmatpush2.bf16.msra.mxu0 %v657
        %749 = vmatprep.subr.bf16.mxu0 %v656
        %750 = vmatpush2.bf16.msra.mxu0 %v655
        %751 = vmatprep.subr.bf16.mxu0 %v654
        %752 = vmatpush2.bf16.msra.mxu0 %v653
        %753 = vmatprep.subr.bf16.mxu0 %v652
        %754 = vmatpush2.bf16.msra.mxu0 %v651
        %755 = vmatprep.subr.bf16.mxu0 %v650
        %756 = vmatpush2.bf16.msra.mxu0 %v649
        %757 = vmatprep.subr.bf16.mxu0 %v648
        %758 = vmatpush2.bf16.msra.mxu0 %v647
        %759 = vmatprep.mubr.bf16.mxu0 %v418
        %760 = vmatmul.mubr.bf16.gmra.mxu0 %v404
        %v761 = vpop.f32.mrf.mxu0
        %v762 = vadd.f32 %v480, %v761
        %v763 = vpop.f32.mrf.mxu0
        %v764 = vadd.f32 %v484, %v763
        %v765 = vpop.f32.mrf.mxu0
        %v766 = vadd.f32 %v480, %v765
        %v767 = vpop.f32.mrf.mxu0
        %v768 = vadd.f32 %v484, %v767
        %769 = vdwg.mxu0
        %770 = vmatprep.subr.bf16.mxu0 %v678
        %771 = vmatpush1.bf16.msra.mxu0 %v677
        %772 = vmatprep.subr.bf16.mxu0 %v676
        %773 = vmatpush1.bf16.msra.mxu0 %v675
        %774 = vmatprep.subr.bf16.mxu0 %v674
        %775 = vmatpush1.bf16.msra.mxu0 %v673
        %776 = vmatprep.subr.bf16.mxu0 %v672
        %777 = vmatpush1.bf16.msra.mxu0 %v671
        %778 = vmatprep.subr.bf16.mxu0 %v670
        %779 = vmatpush1.bf16.msra.mxu0 %v669
        %780 = vmatprep.subr.bf16.mxu0 %v668
        %781 = vmatpush1.bf16.msra.mxu0 %v667
        %782 = vmatprep.subr.bf16.mxu0 %v666
        %783 = vmatpush1.bf16.msra.mxu0 %v665
        %784 = vmatprep.subr.bf16.mxu0 %v664
        %785 = vmatpush1.bf16.msra.mxu0 %v663
        %786 = vmatprep.subr.bf16.mxu0 0
        %787 = vmatpush2.bf16.msra.mxu0 0
        %788 = vmatprep.subr.bf16.mxu0 0
        %789 = vmatpush2.bf16.msra.mxu0 0
        %790 = vmatprep.subr.bf16.mxu0 0
        %791 = vmatpush2.bf16.msra.mxu0 0
        %792 = vmatprep.subr.bf16.mxu0 0
        %793 = vmatpush2.bf16.msra.mxu0 0
        %794 = vmatprep.subr.bf16.mxu0 0
        %795 = vmatpush2.bf16.msra.mxu0 0
        %796 = vmatprep.subr.bf16.mxu0 0
        %797 = vmatpush2.bf16.msra.mxu0 0
        %798 = vmatprep.subr.bf16.mxu0 0
        %799 = vmatpush2.bf16.msra.mxu0 0
        %800 = vmatprep.subr.bf16.mxu0 0
        %801 = vmatpush2.bf16.msra.mxu0 0
        %802 = vmatprep.mubr.bf16.mxu0 0
        %803 = vmatmul.mubr.bf16.gmra.mxu0 %v425
        %v804 = vpop.f32.mrf.mxu0
        %v805 = vadd.f32 %v762, %v804
        %v806 = vpop.f32.mrf.mxu0
        %v807 = vadd.f32 %v764, %v806
        %v808 = vpop.f32.mrf.mxu0
        %v809 = vadd.f32 %v766, %v808
        %v810 = vpop.f32.mrf.mxu0
        %v811 = vadd.f32 %v768, %v810
        %812 = vdwg.mxu0
        %v813 = vmax.f32 %v805, 0.0
        %v814 = vmax.f32 %v807, 0.0
        %v815 = vmax.f32 %v809, 0.0
        %v816 = vmax.f32 %v811, 0.0
        %v817 = vpack.c.bf16 %v815, %v813
        %v818 = vpack.c.bf16 %v816, %v814
        %v819 = vld [vmem:[%s5] sm:$0xf]
        %v820 = vld [vmem:[%s5 + $0x4] sm:$0xf]
        %v821 = vld [vmem:[%s5 + $0x8] sm:$0xf]
        %v822 = vld [vmem:[%s5 + $0xc] sm:$0xf]
        %v823 = vld [vmem:[%s5 + $0x10] sm:$0xf]
        %v824 = vld [vmem:[%s5 + $0x14] sm:$0xf]
        %v825 = vld [vmem:[%s5 + $0x18] sm:$0xf]
        %v826 = vld [vmem:[%s5 + $0x1c] sm:$0xf]
        %v827 = vld [vmem:[%s5 + $0x20] sm:$0xf]
        %v828 = vld [vmem:[%s5 + $0x24] sm:$0xf]
        %v829 = vld [vmem:[%s5 + $0x28] sm:$0xf]
        %v830 = vld [vmem:[%s5 + $0x2c] sm:$0xf]
        %v831 = vld [vmem:[%s5 + $0x30] sm:$0xf]
        %v832 = vld [vmem:[%s5 + $0x34] sm:$0xf]
        %v833 = vld [vmem:[%s5 + $0x38] sm:$0xf]
        %v834 = vld [vmem:[%s5 + $0x3c] sm:$0xf]
        %v835 = vld [vmem:[%s5 + $0x40] sm:$0xf]
        %v836 = vld [vmem:[%s5 + $0x44] sm:$0xf]
        %v837 = vld [vmem:[%s5 + $0x48] sm:$0xf]
        %v838 = vld [vmem:[%s5 + $0x4c] sm:$0xf]
        %v839 = vld [vmem:[%s5 + $0x50] sm:$0xf]
        %v840 = vld [vmem:[%s5 + $0x54] sm:$0xf]
        %v841 = vld [vmem:[%s5 + $0x58] sm:$0xf]
        %v842 = vld [vmem:[%s5 + $0x5c] sm:$0xf]
        %v843 = vld [vmem:[%s5 + $0x60] sm:$0xf]
        %v844 = vld [vmem:[%s5 + $0x64] sm:$0xf]
        %v845 = vld [vmem:[%s5 + $0x68] sm:$0xf]
        %v846 = vld [vmem:[%s5 + $0x6c] sm:$0xf]
        %v847 = vld [vmem:[%s5 + $0x70] sm:$0xf]
        %v848 = vld [vmem:[%s5 + $0x74] sm:$0xf]
        %v849 = vld [vmem:[%s5 + $0x78] sm:$0xf]
        %v850 = vld [vmem:[%s5 + $0x7c] sm:$0xf]
        %v851 = vld [vmem:[%s6] sm:$0x1]
        %v853 = vlaneseq
        %v854 = vshrl.u32 %v853, 7
        %v855 = vsub.s32 0, %v854
        %v856 = vrot.slane %v851, %v855
        %v890 = vunpack.c.l.b16 %v819
        %v891 = vunpack.c.l.b16 %v820
        %v892 = vunpack.c.l.b16 %v821
        %v893 = vunpack.c.l.b16 %v822
        %v894 = vunpack.c.l.b16 %v823
        %v895 = vunpack.c.l.b16 %v824
        %v896 = vunpack.c.l.b16 %v825
        %v897 = vunpack.c.l.b16 %v826
        %v898 = vunpack.c.l.b16 %v827
        %v899 = vunpack.c.l.b16 %v828
        %v900 = vunpack.c.l.b16 %v829
        %v901 = vunpack.c.l.b16 %v830
        %v902 = vunpack.c.l.b16 %v831
        %v903 = vunpack.c.l.b16 %v832
        %v904 = vunpack.c.l.b16 %v833
        %v905 = vunpack.c.l.b16 %v834
        %v906 = vunpack.c.l.b16 %v835
        %v907 = vunpack.c.l.b16 %v836
        %v908 = vunpack.c.l.b16 %v837
        %v909 = vunpack.c.l.b16 %v838
        %v910 = vunpack.c.l.b16 %v839
        %v911 = vunpack.c.l.b16 %v840
        %v912 = vunpack.c.l.b16 %v841
        %v913 = vunpack.c.l.b16 %v842
        %v914 = vunpack.c.l.b16 %v843
        %v915 = vunpack.c.l.b16 %v844
        %v916 = vunpack.c.l.b16 %v845
        %v917 = vunpack.c.l.b16 %v846
        %v918 = vunpack.c.l.b16 %v847
        %v919 = vunpack.c.l.b16 %v848
        %v920 = vunpack.c.l.b16 %v849
        %v921 = vunpack.c.l.b16 %v850
        %v922 = vpack.c.b16 %v891, %v890
        %v923 = vpack.c.b16 %v893, %v892
        %v924 = vpack.c.b16 %v895, %v894
        %v925 = vpack.c.b16 %v897, %v896
        %v926 = vpack.c.b16 %v899, %v898
        %v927 = vpack.c.b16 %v901, %v900
        %v928 = vpack.c.b16 %v903, %v902
        %v929 = vpack.c.b16 %v905, %v904
        %v930 = vpack.c.b16 %v907, %v906
        %v931 = vpack.c.b16 %v909, %v908
        %v932 = vpack.c.b16 %v911, %v910
        %v933 = vpack.c.b16 %v913, %v912
        %v934 = vpack.c.b16 %v915, %v914
        %v935 = vpack.c.b16 %v917, %v916
        %v936 = vpack.c.b16 %v919, %v918
        %v937 = vpack.c.b16 %v921, %v920
        %954 = vmatprep.subr.bf16.mxu0 0
        %955 = vmatpush1.bf16.msra.mxu0 %v929
        %956 = vmatprep.subr.bf16.mxu0 0
        %957 = vmatpush1.bf16.msra.mxu0 %v928
        %958 = vmatprep.subr.bf16.mxu0 0
        %959 = vmatpush1.bf16.msra.mxu0 %v927
        %960 = vmatprep.subr.bf16.mxu0 0
        %961 = vmatpush1.bf16.msra.mxu0 %v926
        %962 = vmatprep.subr.bf16.mxu0 0
        %963 = vmatpush1.bf16.msra.mxu0 %v925
        %964 = vmatprep.subr.bf16.mxu0 0
        %965 = vmatpush1.bf16.msra.mxu0 %v924
        %966 = vmatprep.subr.bf16.mxu0 0
        %967 = vmatpush1.bf16.msra.mxu0 %v923
        %968 = vmatprep.subr.bf16.mxu0 0
        %969 = vmatpush1.bf16.msra.mxu0 %v922
        %970 = vmatprep.subr.bf16.mxu0 0
        %971 = vmatpush2.bf16.msra.mxu0 %v937
        %972 = vmatprep.subr.bf16.mxu0 0
        %973 = vmatpush2.bf16.msra.mxu0 %v936
        %974 = vmatprep.subr.bf16.mxu0 0
        %975 = vmatpush2.bf16.msra.mxu0 %v935
        %976 = vmatprep.subr.bf16.mxu0 0
        %977 = vmatpush2.bf16.msra.mxu0 %v934
        %978 = vmatprep.subr.bf16.mxu0 0
        %979 = vmatpush2.bf16.msra.mxu0 %v933
        %980 = vmatprep.subr.bf16.mxu0 0
        %981 = vmatpush2.bf16.msra.mxu0 %v932
        %982 = vmatprep.subr.bf16.mxu0 0
        %983 = vmatpush2.bf16.msra.mxu0 %v931
        %984 = vmatprep.subr.bf16.mxu0 0
        %985 = vmatpush2.bf16.msra.mxu0 %v930
        %986 = vmatprep.mubr.bf16.mxu0 %v818
        %987 = vmatmul.mubr.bf16.gmra.mxu0 %v817
        %v988 = vpop.f32.mrf.mxu0
        %v989 = vadd.f32 %v856, %v988
        %v990 = vpop.f32.mrf.mxu0
        %v991 = vpop.f32.mrf.mxu0
        %v992 = vadd.f32 %v856, %v991
        %v993 = vpop.f32.mrf.mxu0
        %994 = vdwg.mxu0
        %vm998 = vcmask 1046528
        %v999 = vrot.slane %v323, 1
        %v1000 = vrot.slane %v324, 1
        %v1001 = vsel %vm998, %v999, %v1000
        %v1002 = vrot.slane %v325, 1
        %v1003 = vsel %vm998, %v1000, %v1002
        %v1006 = vadd.f32 %v989, %v1001
        %v1007 = vadd.f32 %v992, %v1003
        %1008 = vst [vmem:[%s310] sm:$0xff] %v1006
        %1009 = vst [vmem:[%s310 + $0x8] sm:$0xff] %v1007
        %s1010 = sand.u32 %s198, 1
        %s1011 = scalar_lea.sflag [#allocation4], %s1010
        %s1012 = sand.u32 %s198, 1
        %s1013 = smul.addr %s1012, 16
        %s1014 = scalar_lea.vmem [#allocation5], %s1013
        // Predicated region
        $region53: #{tpu_custom_call.1} parent=47 // pred_check
          %p1015 = pneg %p208
        $region54: #{tpu_custom_call.1} parent=47 // pred_check_branch
          %1017 = sbr.rel (%p1015) target = $region56
        $region55: #{tpu_custom_call.1} parent=47 // pred_region
          %s1018 = smul.u32 2, %s27
          %s1020 = ssub.s32 256, 256
          %1021 = vsyncadd %s1011, %s1020
          %s1022 = smul.addr %s26, 4
          %s1023 = sadd.s32 %s1018, %s1022
          %s1024 = smul.addr %s1023, 128
          %s1025 = scalar_lea.hbm %s7, %s1024
          %s1026 = sshll.u32 %s1014, 4
          %s1027 = int_to_ptr.vmem [resolvable:$true] %s1026
          %1032 = dma.vmem_to_hbm [thread:$0]  %s1027, 256, %s1025, %s1011, 128, 128, 8
        $region56: #{tpu_custom_call.1} parent=47 // pred_fallthru
          _
      $region48: #{tpu_custom_call.1} parent=5 // pred_fallthru
        _
      %p1033 = scmp.le.s32.totalorder 2, %s17
      // Predicated region
      $region57: #{tpu_custom_call.1} parent=5 // pred_check
        %p1034 = pneg %p1033
      $region58: #{tpu_custom_call.1} parent=5 // pred_check_branch
        %1036 = sbr.rel (%p1034) target = $region60
      $region59: #{tpu_custom_call.1} parent=5 // pred_region
        %s1037 = ssub.s32 %s17, 2
        // Predicated region
        $region61: #{tpu_custom_call.1} parent=59 // pred_check
          %p1038 = pneg %p214
        $region62: #{tpu_custom_call.1} parent=59 // pred_check_branch
          %1040 = sbr.rel (%p1038) target = $region64
        $region63: #{tpu_custom_call.1} parent=59 // pred_region
          %s1041 = sand.u32 %s199, 1
          %s1042 = scalar_lea.sflag [#allocation4], %s1041
          %s1043 = sand.u32 %s199, 1
          %s1044 = smul.addr %s1043, 16
          %s1045 = scalar_lea.vmem [#allocation5], %s1044
          %1046 = dma.done %s1042, 256
        $region64: #{tpu_custom_call.1} parent=59 // pred_fallthru
          _
      $region60: #{tpu_custom_call.1} parent=5 // pred_fallthru
        _
    $region6: #{tpu_custom_call.1} parent=1 // loop_footer
      %s21 = sadd.s32 1, %s17
    $region7: #{tpu_custom_call.1} parent=1 // loop_footer_branch
      %16 = sbr.rel target = $region3
    $region8: #{tpu_custom_call.1} parent=1 // loop_exit
      _
    %1047 = vsyncpa [#allocation3], 1
    %s1048 = scalar_lea.sflag [#allocation3], 1
    %1049 = vsyncpa %s1048, 1
    %1050 = vsyncpa [#allocation4], 1
    %s1051 = scalar_lea.sflag [#allocation4], 1
    %1052 = vsyncpa %s1051, 1

</llo_original>
